<compile_context>
chip_gen: v7x
topology: tpu7x:2x2x1
jax: 0.10.0
libtpu: 0.0.40
codegen_flags: <defaults>
</compile_context>

<pallas_src>
import functools

import jax
import jax.numpy as jnp
from jax.experimental import pallas as pl
from jax.experimental.pallas import tpu as pltpu

F32 = jnp.float32
BF16 = jnp.bfloat16
GROUPS = 32
SE_REDUCTION = 16
# (planes, num_blocks, stride) exactly as se_resnext50_32x4d
LAYER_CFG = [(64, 3, 1), (128, 4, 2), (256, 6, 2), (512, 3, 2)]


def _round_up(n, m):
    return ((n + m - 1) // m) * m


# ----------------------------------------------------------------------------
# Pallas kernels
# ----------------------------------------------------------------------------
def _bmm_fused_kernel(a_ref, b_ref, s_ref, c_ref, o_ref, acc_ref, *, relu):
    # bf16 MXU matmul, f32 accumulation staged in VMEM, fused BN scale/bias(+ReLU).
    acc_ref[...] = jnp.dot(a_ref[...], b_ref[...], preferred_element_type=jnp.float32)
    y = acc_ref[...] * s_ref[...] + c_ref[...]
    if relu:
        y = jnp.maximum(y, 0.0)
    o_ref[...] = y.astype(o_ref.dtype)


def pallas_bmm_fused(a, b, scale, bias, *, relu, out_dtype=BF16):
    """(batched) matmul a[G,M,K] @ b[G,K,N] with fused per-channel scale/bias.

    Output is channel-concatenated: [M, G*N] (group-major channels), so the
    packed grouped conv needs no post-transpose.  Inputs a/b are bf16, scale
    and bias are f32 [G,1,N]; accumulation is f32.
    """
    G, M, K = a.shape
    Gb, Kb, N = b.shape
    assert G == Gb and K == Kb
    TM = 256 if M >= 512 else _round_up(M, 16)
    Mp = _round_up(M, TM)
    TN = 128 if N <= 128 else 256
    Np = _round_up(N, TN)
    assert G == 1 or Np == N  # grouped path is always lane-exact (N == 128)
    if Mp != M:
        a = jnp.pad(a, ((0, 0), (0, Mp - M), (0, 0)))
    if Np != N:
        b = jnp.pad(b, ((0, 0), (0, 0), (0, Np - N)))
        scale = jnp.pad(scale, ((0, 0), (0, 0), (0, Np - N)))
        bias = jnp.pad(bias, ((0, 0), (0, 0), (0, Np - N)))
    nj = Np // TN
    out = pl.pallas_call(
        functools.partial(_bmm_fused_kernel, relu=relu),
        out_shape=jax.ShapeDtypeStruct((Mp, G * Np), out_dtype),
        grid=(Mp // TM, G, nj),                    # largest parallel axis first
        in_specs=[
            pl.BlockSpec((None, TM, K), lambda i, g, j: (g, i, 0)),
            pl.BlockSpec((None, K, TN), lambda i, g, j: (g, 0, j)),
            pl.BlockSpec((None, 1, TN), lambda i, g, j: (g, 0, j)),
            pl.BlockSpec((None, 1, TN), lambda i, g, j: (g, 0, j)),
        ],
        out_specs=pl.BlockSpec((TM, TN), lambda i, g, j: (i, g * nj + j)),
        scratch_shapes=[pltpu.VMEM((TM, TN), jnp.float32)],
        compiler_params=pltpu.CompilerParams(
            dimension_semantics=("parallel", "parallel", "parallel")),
    )(a, b, scale, bias)
    out = out[:M]
    if Np != N:
        out = out[:, :N]
    return out


def _se_mlp_kernel(p_ref, w1_ref, b1_ref, w2_ref, b2_ref, o_ref):
    # sigmoid(relu(pooled @ w1 + b1) @ w2 + b2), all f32 (tiny matmuls).
    h = jnp.dot(p_ref[...], w1_ref[...], preferred_element_type=jnp.float32) + b1_ref[...]
    h = jnp.maximum(h, 0.0)
    s = jnp.dot(h, w2_ref[...], preferred_element_type=jnp.float32) + b2_ref[...]
    o_ref[...] = 1.0 / (1.0 + jnp.exp(-s))


def se_scale(pooled, w1, b1, w2, b2):
    B, C = pooled.shape
    Bp = _round_up(B, 8)
    if Bp != B:
        pooled = jnp.pad(pooled, ((0, Bp - B), (0, 0)))
    cr = w1.shape[1]
    out = pl.pallas_call(
        _se_mlp_kernel,
        out_shape=jax.ShapeDtypeStruct((Bp, C), F32),
        grid=(1,),
        in_specs=[
            pl.BlockSpec((Bp, C), lambda i: (0, 0)),
            pl.BlockSpec((C, cr), lambda i: (0, 0)),
            pl.BlockSpec((1, cr), lambda i: (0, 0)),
            pl.BlockSpec((cr, C), lambda i: (0, 0)),
            pl.BlockSpec((1, C), lambda i: (0, 0)),
        ],
        out_specs=pl.BlockSpec((Bp, C), lambda i: (0, 0)),
    )(pooled, w1, b1, w2, b2)
    return out[:B]


def _se_merge_kernel(x_ref, s_ref, r_ref, o_ref):
    # relu(x * channel_scale + residual), math in f32, store bf16
    y = x_ref[...].astype(jnp.float32) * s_ref[...] + r_ref[...].astype(jnp.float32)
    o_ref[...] = jnp.maximum(y, 0.0).astype(o_ref.dtype)


def se_merge_add_relu(x, s, residual):
    B, H, W, C = x.shape
    HW = H * W
    HWp = _round_up(HW, 8)
    xr = x.reshape(B, HW, C)
    rr = residual.reshape(B, HW, C)
    if HWp != HW:
        xr = jnp.pad(xr, ((0, 0), (0, HWp - HW), (0, 0)))
        rr = jnp.pad(rr, ((0, 0), (0, HWp - HW), (0, 0)))
    sr = s.reshape(B, 1, C)
    # Large HBM-bound tiles: whole image per block unless that exceeds ~1K rows.
    TR = HWp
    if HWp > 1024:
        for cand in range(1024, 15, -16):
            if HWp % cand == 0:
                TR = cand
                break
    out = pl.pallas_call(
        _se_merge_kernel,
        out_shape=jax.ShapeDtypeStruct((B, HWp, C), x.dtype),
        grid=(B, HWp // TR),
        in_specs=[
            pl.BlockSpec((None, TR, C), lambda b, i: (b, i, 0)),
            pl.BlockSpec((None, 1, C), lambda b, i: (b, 0, 0)),
            pl.BlockSpec((None, TR, C), lambda b, i: (b, i, 0)),
        ],
        out_specs=pl.BlockSpec((None, TR, C), lambda b, i: (b, i, 0)),
        compiler_params=pltpu.CompilerParams(
            dimension_semantics=("parallel", "parallel")),
    )(xr, sr, rr)
    return out[:, :HW].reshape(B, H, W, C)


def _head_kernel(f_ref, w_ref, b_ref, o_ref, *, normalize):
    # AvgPool2d(7,1,0) over 7x7, squeeze, Linear(2048, f_dim), optional L2 norm
    pooled = jnp.mean(f_ref[...].astype(jnp.float32), axis=1)              # [B, 2048]
    y = jnp.dot(pooled, w_ref[...], preferred_element_type=jnp.float32) + b_ref[...]
    if normalize:
        n = jnp.sqrt(jnp.sum(y * y, axis=1, keepdims=True))
        y = y / jnp.maximum(n, 1e-12)                                      # F.normalize
    o_ref[...] = y


def head_pool_fc(feat, fc_w, fc_b, normalize):
    B, HW, C = feat.shape
    f_dim = fc_w.shape[1]
    return pl.pallas_call(
        functools.partial(_head_kernel, normalize=normalize),
        out_shape=jax.ShapeDtypeStruct((B, f_dim), F32),
        grid=(1,),
        in_specs=[
            pl.BlockSpec((B, HW, C), lambda i: (0, 0, 0)),
            pl.BlockSpec((C, f_dim), lambda i: (0, 0)),
            pl.BlockSpec((1, f_dim), lambda i: (0, 0)),
        ],
        out_specs=pl.BlockSpec((B, f_dim), lambda i: (0, 0)),
    )(feat, fc_w, fc_b)


# ----------------------------------------------------------------------------
# Conv wrappers (data movement only; the matmul + BN epilogue is Pallas)
# ----------------------------------------------------------------------------
def conv1x1_bn(x, w, bn, *, relu, stride=1):
    """Dense 1x1 conv + folded BN (+ReLU). w: [Cin, Cout] bf16."""
    B, H, W, C = x.shape
    if stride != 1:
        x = x[:, ::stride, ::stride, :]
        H, W = x.shape[1], x.shape[2]
    a = x.reshape(1, B * H * W, C)
    out = pallas_bmm_fused(a, w[None], bn["scale"][None], bn["bias"][None],
                           relu=relu, out_dtype=x.dtype)
    return out.reshape(B, H, W, w.shape[1])


def grouped_conv3x3_bn_relu(x, wp, bn, *, stride):
    """Grouped 3x3 conv (G=32) + folded BN + ReLU.

    wp: [NB, 9*P*cin_g, P*cout_g] bf16, block-diagonal over the P groups packed
    into each batch so every MXU output tile is 128 lanes wide.  Patches are
    emitted directly in [NB, M, K] layout (channel slice first -> no transpose).
    """
    B, H, W, C = x.shape
    NB, K, N = wp.shape
    Cb = C // NB                                  # channels per packed batch
    xp = jnp.pad(x, ((0, 0), (1, 1), (1, 1), (0, 0)))
    Ho = (H + 2 - 3) // stride + 1
    Wo = (W + 2 - 3) // stride + 1
    M = B * Ho * Wo
    parts = []
    for q in range(NB):
        xq = xp[..., q * Cb:(q + 1) * Cb]
        cols = []
        for di in range(3):
            for dj in range(3):
                cols.append(xq[:, di:di + (Ho - 1) * stride + 1:stride,
                               dj:dj + (Wo - 1) * stride + 1:stride, :])
        parts.append(jnp.stack(cols, axis=3).reshape(M, 9 * Cb))
    a = jnp.stack(parts, axis=0)                  # [NB, M, 9*Cb] bf16
    scale = bn["scale"].reshape(NB, 1, N)
    bias = bn["bias"].reshape(NB, 1, N)
    out = pallas_bmm_fused(a, wp, scale, bias, relu=True, out_dtype=x.dtype)
    return out.reshape(B, Ho, Wo, NB * N)         # group-major channels


def extract_patches_7x7_s2_p3(x):
    B, H, W, C = x.shape
    xp = jnp.pad(x, ((0, 0), (3, 3), (3, 3), (0, 0)))
    Ho = (H + 6 - 7) // 2 + 1
    Wo = (W + 6 - 7) // 2 + 1
    cols = []
    for di in range(7):
        for dj in range(7):
            cols.append(xp[:, di:di + 2 * (Ho - 1) + 1:2,
                           dj:dj + 2 * (Wo - 1) + 1:2, :])
    p = jnp.stack(cols, axis=3)                   # [B, Ho, Wo, 49, C]
    return p, Ho, Wo


def maxpool_3x3_s2_ceil(x):
    # nn.MaxPool2d(3, stride=2, ceil_mode=True) -- small one-off op, kept as glue
    B, H, W, C = x.shape
    Ho = -(-(H - 3) // 2) + 1
    Wo = -(-(W - 3) // 2) + 1
    xp = jnp.pad(x, ((0, 0), (0, 1), (0, 1), (0, 0)), constant_values=-jnp.inf)
    out = None
    for di in range(3):
        for dj in range(3):
            s = xp[:, di:di + 2 * (Ho - 1) + 1:2, dj:dj + 2 * (Wo - 1) + 1:2, :]
            out = s if out is None else jnp.maximum(out, s)
    return out


# ----------------------------------------------------------------------------
# SE-ResNeXt blocks
# ----------------------------------------------------------------------------
@functools.partial(jax.jit, static_argnames=("stride", "downsample"))
def se_bottleneck(x, p, stride, downsample):
    residual = x
    out = conv1x1_bn(x, p["conv1"], p["bn1"], relu=True)
    out = grouped_conv3x3_bn_relu(out, p["conv2"], p["bn2"], stride=stride)
    out = conv1x1_bn(out, p["conv3"], p["bn3"], relu=False)
    if downsample:
        residual = conv1x1_bn(x, p["down_conv"], p["down_bn"],
                              relu=False, stride=stride)
    # Squeeze-and-Excitation (global avg pool kept as tiny XLA reduction).
    B, H, W, C = out.shape
    pooled = jnp.mean(out.reshape(B, H * W, C).astype(F32), axis=1)
    s = se_scale(pooled, p["se_w1"], p["se_b1"], p["se_w2"], p["se_b2"])
    return se_merge_add_relu(out, s, residual)     # relu(out * s + residual)


@jax.jit
def stem_forward(x, conv_w, bn):
    patches, Ho, Wo = extract_patches_7x7_s2_p3(x)
    B, _, _, C = x.shape
    a = patches.reshape(1, B * Ho * Wo, 49 * C)
    out = pallas_bmm_fused(a, conv_w[None], bn["scale"][None], bn["bias"][None],
                           relu=True, out_dtype=x.dtype)
    out = out.reshape(B, Ho, Wo, -1)
    return maxpool_3x3_s2_ceil(out)


# ----------------------------------------------------------------------------
# Deterministic parameter init (shapes of se_resnext50_32x4d; no checkpoint)
# ----------------------------------------------------------------------------
def init_params(key, f_dim):
    # TODO(synk): ImageNet-pretrained weights cannot be loaded here; deterministic
    # random init with the exact architecture shapes is used instead.  (If real
    # PyTorch weights are ever loaded, match the tap-major / group-packed K
    # ordering used below.)
    cnt = [0]

    def rnd(shape, scale=1.0):
        cnt[0] += 1
        return scale * jax.random.normal(jax.random.fold_in(key, cnt[0]), shape, F32)

    def conv1x1_w(cin, cout):
        return rnd((cin, cout), (2.0 / cin) ** 0.5).astype(BF16)

    def stem_w():
        return rnd((49 * 3, 64), (2.0 / (49 * 3)) ** 0.5).astype(BF16)

    def grouped_w_packed(width):
        cg = width // GROUPS                       # cin_g == cout_g
        fan_in = 9 * cg
        w = rnd((GROUPS, 9 * cg, cg), (2.0 / fan_in) ** 0.5)
        P = min(GROUPS, max(1, 128 // cg))         # groups packed per MXU call
        NB = GROUPS // P
        w5 = w.reshape(NB, P, 9, cg, cg)           # (q, p, tap, ci, co)
        wp = jnp.zeros((NB, 9, P, cg, P, cg), F32)
        for pi in range(P):                        # block-diagonal placement
            wp = wp.at[:, :, pi, :, pi, :].set(w5[:, pi])
        return wp.reshape(NB, 9 * P * cg, P * cg).astype(BF16)

    def bn_p(c):
        gamma = 1.0 + 0.05 * rnd((1, c))
        beta = 0.05 * rnd((1, c))
        mean = 0.05 * rnd((1, c))
        var = jnp.ones((1, c), F32)
        scale = gamma / jnp.sqrt(var + 1e-5)
        return {"scale": scale, "bias": beta - mean * scale}

    params = {"stem_conv": stem_w(), "stem_bn": bn_p(64)}
    inplanes = 64
    layers = []
    for planes, nblocks, stride in LAYER_CFG:
        blocks = []
        for bi in range(nblocks):
            s = stride if bi == 0 else 1
            down = bi == 0 and (s != 1 or inplanes != planes * 4)
            width = (planes * 4 // 64) * GROUPS    # 128/256/512/1024
            cout = planes * 4
            cr = cout // SE_REDUCTION
            p = {
                "conv1": conv1x1_w(inplanes, width),
                "bn1": bn_p(width),
                "conv2": grouped_w_packed(width),
                "bn2": bn_p(width),
                "conv3": conv1x1_w(width, cout),
                "bn3": bn_p(cout),
                "se_w1": rnd((cout, cr), (2.0 / cout) ** 0.5),
                "se_b1": jnp.zeros((1, cr), F32),
                "se_w2": rnd((cr, cout), (2.0 / cr) ** 0.5),
                "se_b2": jnp.zeros((1, cout), F32),
            }
            if down:
                p["down_conv"] = conv1x1_w(inplanes, cout)
                p["down_bn"] = bn_p(cout)
            blocks.append({"params": p, "stride": s, "down": down})
            inplanes = cout
        layers.append(blocks)
    params["layers"] = layers
    params["fc_w"] = rnd((2048, f_dim), (1.0 / 2048.0) ** 0.5)  # Linear weight^T
    params["fc_b"] = jnp.zeros((1, f_dim), F32)
    return params


# ----------------------------------------------------------------------------
# Full forward (mirrors Resnext50.forward)
# ----------------------------------------------------------------------------
def resnext50_forward(x_nchw, params, norm=False):
    x = jnp.transpose(x_nchw, (0, 2, 3, 1)).astype(BF16)   # NCHW -> NHWC bf16
    x = stem_forward(x, params["stem_conv"], params["stem_bn"])
    for blocks in params["layers"]:
        for blk in blocks:
            x = se_bottleneck(x, blk["params"], stride=blk["stride"],
                              downsample=blk["down"])
    B, H, W, C = x.shape
    assert (H, W, C) == (7, 7, 2048), (H, W, C)
    feat = x.reshape(B, H * W, C)
    return head_pool_fc(feat, params["fc_w"], params["fc_b"], normalize=norm)


if __name__ == "__main__":
    key = jax.random.PRNGKey(0)
    f_dim = 128
    params = init_params(jax.random.fold_in(key, 1), f_dim)
    # AvgPool2d(7) -> 1x1 requires the canonical 224x224 input; batch kept small.
    x = jax.random.normal(jax.random.fold_in(key, 2), (2, 3, 224, 224), F32)
    out = resnext50_forward(x, params, norm=False)
    out = jax.block_until_ready(out)
    assert out.shape == (2, f_dim) and bool(jnp.all(jnp.isfinite(out)))
    print("KERNEL_OK")
</pallas_src>

<mosaic_0001>
module attributes {stable_mosaic.version = 11 : i64} {
  func.func @_bmm_fused_kernel(%arg0: i32, %arg1: i32, %arg2: i32, %arg3: memref<1x256x147xbf16, #tpu.memory_space<vmem>>, %arg4: memref<1x147x128xbf16, #tpu.memory_space<vmem>>, %arg5: memref<1x1x128xf32, #tpu.memory_space<vmem>>, %arg6: memref<1x1x128xf32, #tpu.memory_space<vmem>>, %arg7: memref<256x128xbf16, #tpu.memory_space<vmem>>, %arg8: memref<256x128xf32, #tpu.memory_space<vmem>>) attributes {dimension_semantics = [#tpu.dimension_semantics<parallel>, #tpu.dimension_semantics<parallel>, #tpu.dimension_semantics<parallel>], iteration_bounds = array<i64: 98, 1, 1>, scalar_prefetch = 0 : i64, scratch_operands = 1 : i64, tpu.core_type = #tpu.core_type<tc>, window_params = [{transform_indices = @transform_0, window_bounds = array<i64: 1, 256, 147>}, {transform_indices = @transform_1, window_bounds = array<i64: 1, 147, 128>}, {transform_indices = @transform_2, window_bounds = array<i64: 1, 1, 128>}, {transform_indices = @transform_3, window_bounds = array<i64: 1, 1, 128>}, {transform_indices = @transform_4, window_bounds = array<i64: 256, 128>}]} {
    %c0 = arith.constant 0 : index
    %c0_0 = arith.constant 0 : index
    %c0_1 = arith.constant 0 : index
    %0 = vector.load %arg3[%c0, %c0_0, %c0_1] : memref<1x256x147xbf16, #tpu.memory_space<vmem>>, vector<1x256x147xbf16>
    %1 = vector.shape_cast %0 : vector<1x256x147xbf16> to vector<256x147xbf16>
    %c0_2 = arith.constant 0 : index
    %c0_3 = arith.constant 0 : index
    %c0_4 = arith.constant 0 : index
    %2 = vector.load %arg4[%c0_2, %c0_3, %c0_4] : memref<1x147x128xbf16, #tpu.memory_space<vmem>>, vector<1x147x128xbf16>
    %3 = vector.shape_cast %2 : vector<1x147x128xbf16> to vector<147x128xbf16>
    %cst = arith.constant dense<0.000000e+00> : vector<256x128xf32>
    %4 = tpu.matmul %1, %3, %cst {dimension_numbers = #tpu.dot_dimension_numbers<[1], [0], [0], [1], [0, 0, 1, 1], [], []>} : vector<256x147xbf16>, vector<147x128xbf16>, vector<256x128xf32> -> vector<256x128xf32>
    %c0_5 = arith.constant 0 : index
    %c0_6 = arith.constant 0 : index
    %5 = vector.load %arg8[%c0_5, %c0_6] : memref<256x128xf32, #tpu.memory_space<vmem>>, vector<256x128xf32>
    tpu.vector_store %arg8[%c0_5, %c0_6], %4 {strides = array<i32>} : memref<256x128xf32, #tpu.memory_space<vmem>>, vector<256x128xf32>,
    %c0_7 = arith.constant 0 : index
    %c0_8 = arith.constant 0 : index
    %6 = vector.load %arg8[%c0_7, %c0_8] : memref<256x128xf32, #tpu.memory_space<vmem>>, vector<256x128xf32>
    %c0_9 = arith.constant 0 : index
    %c0_10 = arith.constant 0 : index
    %c0_11 = arith.constant 0 : index
    %7 = vector.load %arg5[%c0_9, %c0_10, %c0_11] : memref<1x1x128xf32, #tpu.memory_space<vmem>>, vector<1x1x128xf32>
    %8 = vector.shape_cast %7 : vector<1x1x128xf32> to vector<1x128xf32>
    %9 = vector.broadcast %8 : vector<1x128xf32> to vector<256x128xf32>
    %10 = arith.mulf %6, %9 : vector<256x128xf32>
    %c0_12 = arith.constant 0 : index
    %c0_13 = arith.constant 0 : index
    %c0_14 = arith.constant 0 : index
    %11 = vector.load %arg6[%c0_12, %c0_13, %c0_14] : memref<1x1x128xf32, #tpu.memory_space<vmem>>, vector<1x1x128xf32>
    %12 = vector.shape_cast %11 : vector<1x1x128xf32> to vector<1x128xf32>
    %13 = vector.broadcast %12 : vector<1x128xf32> to vector<256x128xf32>
    %14 = arith.addf %10, %13 : vector<256x128xf32>
    %cst_15 = arith.constant 0.000000e+00 : f32
    %15 = vector.broadcast %cst_15 : f32 to vector<256x128xf32>
    %16 = arith.maximumf %14, %15 : vector<256x128xf32>
    %17 = arith.truncf %16 : vector<256x128xf32> to vector<256x128xbf16>
    %c0_16 = arith.constant 0 : index
    %c0_17 = arith.constant 0 : index
    %18 = vector.load %arg7[%c0_16, %c0_17] : memref<256x128xbf16, #tpu.memory_space<vmem>>, vector<256x128xbf16>
    tpu.vector_store %arg7[%c0_16, %c0_17], %17 {strides = array<i32>} : memref<256x128xbf16, #tpu.memory_space<vmem>>, vector<256x128xbf16>,
    return
  }
  func.func @transform_0(%arg0: i32, %arg1: i32, %arg2: i32) -> (i32, i32, i32) {
    %c0_i32 = arith.constant 0 : i32
    %c0_i32_0 = arith.constant 0 : i32
    return %arg1, %arg0, %c0_i32 : i32, i32, i32
  }
  func.func @transform_1(%arg0: i32, %arg1: i32, %arg2: i32) -> (i32, i32, i32) {
    %c0_i32 = arith.constant 0 : i32
    %c0_i32_0 = arith.constant 0 : i32
    return %arg1, %c0_i32, %arg2 : i32, i32, i32
  }
  func.func @transform_2(%arg0: i32, %arg1: i32, %arg2: i32) -> (i32, i32, i32) {
    %c0_i32 = arith.constant 0 : i32
    %c0_i32_0 = arith.constant 0 : i32
    return %arg1, %c0_i32, %arg2 : i32, i32, i32
  }
  func.func @transform_3(%arg0: i32, %arg1: i32, %arg2: i32) -> (i32, i32, i32) {
    %c0_i32 = arith.constant 0 : i32
    %c0_i32_0 = arith.constant 0 : i32
    return %arg1, %c0_i32, %arg2 : i32, i32, i32
  }
  func.func @transform_4(%arg0: i32, %arg1: i32, %arg2: i32) -> (i32, i32) {
    %c1_i32 = arith.constant 1 : i32
    %0 = arith.muli %arg1, %c1_i32 : i32
    %1 = arith.addi %0, %arg2 : i32
    %c0_i32 = arith.constant 0 : i32
    return %arg0, %1 : i32, i32
  }
}

</mosaic_0001>

<llo_original>
// kernel: stem_forward.1
$region0: #{stem_forward.1}
  #allocation0 [shape = 'u32[]', space=smem, size = 0x4, offset = 0x4, fixed_abs, tag = 'smem constant byte address 0x4 - core index']
  #allocation1 [shape = 'u32[144,128]{1,0:T(1,128)}', space=vmem, size = 0x12000, scoped, tag = 'internal scratch']
  #allocation2 [shape = 'f32[256,128]{1,0:T(8,128)}', space=vmem, size = 0x20000, scoped, tag = 'scratch operand']
  %s0 = inlined_call_operand.vmem [shape: bf16[1,25088,147], index: 0, kind: input, shape index: {}]
  %s1 = inlined_call_operand.vmem [shape: bf16[1,147,128], index: 1, kind: input, shape index: {}]
  %s2 = inlined_call_operand.vmem [shape: f32[1,1,128], index: 2, kind: input, shape index: {}]
  %s3 = inlined_call_operand.vmem [shape: f32[1,1,128], index: 3, kind: input, shape index: {}]
  %s4 = inlined_call_operand.vmem [shape: bf16[25088,128], index: 4, kind: output, shape index: {}]
  %s5 = sld [smem:[#allocation0]]
  $region49: #{stem_forward.1} parent=0
    _
  %s7 = ssub.s32 1, %s5
  %s8 = scalar_select 0, %s7, %s5
  loop: start=0, step=1, limit=100
  $region2: #{stem_forward.1} parent=0 // loop_pre_header
    _
  $region3: #{stem_forward.1} parent=0 // loop_header
    %s10 = sphi 0, %s14
    %p11 = scmp.ge.s32.totalorder %s10, 100
    %s17 = sphi 0, %s36
    %s18 = sphi 0, %s32
    %s19 = sphi 0, %s28
    %s20 = sphi 0, %s17
    %s21 = sphi 0, %s18
    %s22 = sphi 0, %s19
    %s23 = sphi 0, %s20
    %s24 = sphi 0, %s21
    %s25 = sphi 0, %s22
    %s41 = sphi 0, %s43
    %s44 = sphi 0, %s41
    %s45 = sphi 0, %s44
    %s61 = sphi 0, %s45
    %s69 = sphi 0, %s71
    %s72 = sphi 0, %s69
    %s73 = sphi 0, %s72
    %s89 = sphi 0, %s73
    %s97 = sphi 0, %s99
    %s100 = sphi 0, %s97
    %s101 = sphi 0, %s100
    %s117 = sphi 0, %s101
    %s125 = sphi 0, %s127
    %s128 = sphi 0, %s125
    %s129 = sphi 0, %s128
    %s145 = sphi 0, %s129
    %s155 = sphi 0, %s157
    %s158 = sphi 0, %s155
    %s159 = sphi 0, %s158
    %s175 = sphi 0, %s159
  $region4: #{stem_forward.1} parent=0 // loop_header_branch
    %13 = sbr.rel (%p11) target = $region8
  $region5: #{stem_forward.1} parent=0 // loop_body
    %s15 = ssub.s32 %s10, 1
    %s16 = ssub.s32 %s10, 2
    %s26 = sadd.s32 1, %s19
    %p27 = scmp.ge.s32.totalorder %s26, 1
    %s28 = scalar_select %p27, 0, %s26
    %s29 = sadd.s32 1, %s18
    %s30 = scalar_select %p27, %s29, %s18
    %p31 = scmp.ge.s32.totalorder %s30, 1
    %s32 = scalar_select %p31, 0, %s30
    %s33 = sadd.s32 1, %s17
    %s34 = scalar_select %p31, %s33, %s17
    %p35 = scmp.ge.s32.totalorder %s34, 98
    %s36 = scalar_select %p35, 0, %s34
    %s37 = ssub.s32 %s18, %s32
    %s38 = ssub.s32 %s17, %s36
    %s39 = sor.u32 %s37, %s38
    %p40 = scmp.eq.s32.totalorder %s39, 0
    %s42 = sadd.s32 %s41, 1
    %s43 = scalar_select %p40, %s41, %s42
    %p46 = pneg %p40
    %p47 = scmp.eq.s32.totalorder %s10, 97
    %p48 = por %p46, %p47
    %p49 = scmp.ne.s32.totalorder %s41, %s44
    %p50 = scmp.eq.s32.totalorder %s10, 0
    %p51 = por %p49, %p50
    %p52 = scmp.ne.s32.totalorder %s41, %s44
    %p53 = scmp.eq.s32.totalorder %s15, 97
    %p54 = por %p52, %p53
    %p55 = scmp.ne.s32.totalorder %s44, %s45
    %p56 = scmp.eq.s32.totalorder %s15, 0
    %p57 = por %p55, %p56
    %p58 = scmp.ne.s32.totalorder %s44, %s45
    %p59 = scmp.eq.s32.totalorder %s16, 97
    %p60 = por %p58, %p59
    %p62 = scmp.ne.s32.totalorder %s45, %s61
    %p63 = scmp.eq.s32.totalorder %s16, 0
    %p64 = por %p62, %p63
    %s65 = ssub.s32 %s18, %s32
    %s66 = ssub.s32 %s19, %s28
    %s67 = sor.u32 %s65, %s66
    %p68 = scmp.eq.s32.totalorder %s67, 0
    %s70 = sadd.s32 %s69, 1
    %s71 = scalar_select %p68, %s69, %s70
    %p74 = pneg %p68
    %p75 = scmp.eq.s32.totalorder %s10, 97
    %p76 = por %p74, %p75
    %p77 = scmp.ne.s32.totalorder %s69, %s72
    %p78 = scmp.eq.s32.totalorder %s10, 0
    %p79 = por %p77, %p78
    %p80 = scmp.ne.s32.totalorder %s69, %s72
    %p81 = scmp.eq.s32.totalorder %s15, 97
    %p82 = por %p80, %p81
    %p83 = scmp.ne.s32.totalorder %s72, %s73
    %p84 = scmp.eq.s32.totalorder %s15, 0
    %p85 = por %p83, %p84
    %p86 = scmp.ne.s32.totalorder %s72, %s73
    %p87 = scmp.eq.s32.totalorder %s16, 97
    %p88 = por %p86, %p87
    %p90 = scmp.ne.s32.totalorder %s73, %s89
    %p91 = scmp.eq.s32.totalorder %s16, 0
    %p92 = por %p90, %p91
    %s93 = ssub.s32 %s18, %s32
    %s94 = ssub.s32 %s19, %s28
    %s95 = sor.u32 %s93, %s94
    %p96 = scmp.eq.s32.totalorder %s95, 0
    %s98 = sadd.s32 %s97, 1
    %s99 = scalar_select %p96, %s97, %s98
    %p102 = pneg %p96
    %p103 = scmp.eq.s32.totalorder %s10, 97
    %p104 = por %p102, %p103
    %p105 = scmp.ne.s32.totalorder %s97, %s100
    %p106 = scmp.eq.s32.totalorder %s10, 0
    %p107 = por %p105, %p106
    %p108 = scmp.ne.s32.totalorder %s97, %s100
    %p109 = scmp.eq.s32.totalorder %s15, 97
    %p110 = por %p108, %p109
    %p111 = scmp.ne.s32.totalorder %s100, %s101
    %p112 = scmp.eq.s32.totalorder %s15, 0
    %p113 = por %p111, %p112
    %p114 = scmp.ne.s32.totalorder %s100, %s101
    %p115 = scmp.eq.s32.totalorder %s16, 97
    %p116 = por %p114, %p115
    %p118 = scmp.ne.s32.totalorder %s101, %s117
    %p119 = scmp.eq.s32.totalorder %s16, 0
    %p120 = por %p118, %p119
    %s121 = ssub.s32 %s18, %s32
    %s122 = ssub.s32 %s19, %s28
    %s123 = sor.u32 %s121, %s122
    %p124 = scmp.eq.s32.totalorder %s123, 0
    %s126 = sadd.s32 %s125, 1
    %s127 = scalar_select %p124, %s125, %s126
    %p130 = pneg %p124
    %p131 = scmp.eq.s32.totalorder %s10, 97
    %p132 = por %p130, %p131
    %p133 = scmp.ne.s32.totalorder %s125, %s128
    %p134 = scmp.eq.s32.totalorder %s10, 0
    %p135 = por %p133, %p134
    %p136 = scmp.ne.s32.totalorder %s125, %s128
    %p137 = scmp.eq.s32.totalorder %s15, 97
    %p138 = por %p136, %p137
    %p139 = scmp.ne.s32.totalorder %s128, %s129
    %p140 = scmp.eq.s32.totalorder %s15, 0
    %p141 = por %p139, %p140
    %p142 = scmp.ne.s32.totalorder %s128, %s129
    %p143 = scmp.eq.s32.totalorder %s16, 97
    %p144 = por %p142, %p143
    %p146 = scmp.ne.s32.totalorder %s129, %s145
    %p147 = scmp.eq.s32.totalorder %s16, 0
    %p148 = por %p146, %p147
    %s149 = sadd.s32 %s18, %s19
    %s150 = sadd.s32 %s32, %s28
    %s151 = ssub.s32 %s17, %s36
    %s152 = ssub.s32 %s149, %s150
    %s153 = sor.u32 %s151, %s152
    %p154 = scmp.eq.s32.totalorder %s153, 0
    %s156 = sadd.s32 %s155, 1
    %s157 = scalar_select %p154, %s155, %s156
    %p160 = pneg %p154
    %p161 = scmp.eq.s32.totalorder %s10, 97
    %p162 = por %p160, %p161
    %p163 = scmp.ne.s32.totalorder %s155, %s158
    %p164 = scmp.eq.s32.totalorder %s10, 0
    %p165 = por %p163, %p164
    %p166 = scmp.ne.s32.totalorder %s155, %s158
    %p167 = scmp.eq.s32.totalorder %s15, 97
    %p168 = por %p166, %p167
    %p169 = scmp.ne.s32.totalorder %s158, %s159
    %p170 = scmp.eq.s32.totalorder %s15, 0
    %p171 = por %p169, %p170
    %p172 = scmp.ne.s32.totalorder %s158, %s159
    %p173 = scmp.eq.s32.totalorder %s16, 97
    %p174 = por %p172, %p173
    %p176 = scmp.ne.s32.totalorder %s159, %s175
    %p177 = scmp.eq.s32.totalorder %s16, 0
    %p178 = por %p176, %p177
    %p179 = scmp.le.s32.totalorder 1, %s10
    %p180 = scmp.lt.s32.totalorder %s10, 99
    %p181 = pnand %p179, %p180
    %p182 = pneg %p181
    // Predicated region
    $region9: #{stem_forward.1} parent=5 // pred_check
      _
    $region10: #{stem_forward.1} parent=5 // pred_check_branch
      %184 = sbr.rel (%p181) target = $region12
    $region11: #{stem_forward.1} parent=5 // pred_region
      %s185 = ssub.s32 %s10, 1
      // Predicated region
      $region13: #{stem_forward.1} parent=11 // pred_check
        %p186 = pneg %p85
      $region14: #{stem_forward.1} parent=11 // pred_check_branch
        %188 = sbr.rel (%p186) target = $region16
      $region15: #{stem_forward.1} parent=11 // pred_region
        %p189 = scmp.lt.s32.totalorder %s21, 0
        %s190 = scalar_select %p189, %s21, 0
        %p191 = scmp.lt.s32.totalorder %s22, 0
        %s192 = scalar_select %p191, %s22, 0
        %s193 = smul.addr %s190, 19
        %s194 = sadd.s32 %s192, %s193
        %s195 = smul.addr %s194, 4
        %s196 = scalar_lea.vmem %s1, %s195
      $region16: #{stem_forward.1} parent=11 // pred_fallthru
        _
      // Predicated region
      $region17: #{stem_forward.1} parent=11 // pred_check
        %p197 = pneg %p113
      $region18: #{stem_forward.1} parent=11 // pred_check_branch
        %199 = sbr.rel (%p197) target = $region20
      $region19: #{stem_forward.1} parent=11 // pred_region
        %p200 = scmp.lt.s32.totalorder %s21, 0
        %s201 = scalar_select %p200, %s21, 0
        %p202 = scmp.lt.s32.totalorder %s22, 0
        %s203 = scalar_select %p202, %s22, 0
        %s204 = sadd.s32 %s203, %s201
        %s205 = scalar_lea.vmem %s2, %s204
      $region20: #{stem_forward.1} parent=11 // pred_fallthru
        _
      // Predicated region
      $region21: #{stem_forward.1} parent=11 // pred_check
        %p206 = pneg %p141
      $region22: #{stem_forward.1} parent=11 // pred_check_branch
        %208 = sbr.rel (%p206) target = $region24
      $region23: #{stem_forward.1} parent=11 // pred_region
        %p209 = scmp.lt.s32.totalorder %s21, 0
        %s210 = scalar_select %p209, %s21, 0
        %p211 = scmp.lt.s32.totalorder %s22, 0
        %s212 = scalar_select %p211, %s22, 0
        %s213 = sadd.s32 %s212, %s210
        %s214 = scalar_lea.vmem %s3, %s213
      $region24: #{stem_forward.1} parent=11 // pred_fallthru
        _
    $region12: #{stem_forward.1} parent=5 // pred_fallthru
      _
    %p215 = scmp.lt.s32.totalorder %s10, 98
    // Predicated region
    $region25: #{stem_forward.1} parent=5 // pred_check
      %p216 = pneg %p215
    $region26: #{stem_forward.1} parent=5 // pred_check_branch
      %218 = sbr.rel (%p216) target = $region28
    $region27: #{stem_forward.1} parent=5 // pred_region
      // Predicated region
      $region29: #{stem_forward.1} parent=27 // pred_check
        %p219 = pneg %p51
      $region30: #{stem_forward.1} parent=27 // pred_check_branch
        %221 = sbr.rel (%p219) target = $region32
      $region31: #{stem_forward.1} parent=27 // pred_region
        %s222 = smul.u32 32, %s17
        %p223 = scmp.lt.s32.totalorder %s18, 0
        %s224 = scalar_select %p223, %s18, 0
        %p225 = scmp.lt.s32.totalorder %s222, 3135
        %s226 = scalar_select %p225, %s222, 3135
        %s227 = smul.addr %s226, 2
        %s228 = smul.addr %s224, 6272
        %s229 = sadd.s32 %s227, %s228
        %s230 = smul.addr %s229, 4
        %s231 = scalar_lea.vmem %s0, %s230
        %s232 = smul.u32 32, %s17
      $region32: #{stem_forward.1} parent=27 // pred_fallthru
        _
    $region28: #{stem_forward.1} parent=5 // pred_fallthru
      _
    %p233 = scmp.le.s32.totalorder 1, %s10
    %p234 = scmp.lt.s32.totalorder %s10, 99
    %p235 = pnand %p233, %p234
    %p236 = pneg %p235
    // Predicated region
    $region33: #{stem_forward.1} parent=5 // pred_check
      _
    $region34: #{stem_forward.1} parent=5 // pred_check_branch
      %238 = sbr.rel (%p235) target = $region36
    $region35: #{stem_forward.1} parent=5 // pred_region
      %s239 = ssub.s32 %s10, 1
      %s240 = smul.u32 32, %s20
      %p241 = scmp.lt.s32.totalorder %s21, 0
      %s242 = scalar_select %p241, %s21, 0
      %p243 = scmp.lt.s32.totalorder %s240, 3135
      %s244 = scalar_select %p243, %s240, 3135
      %s245 = smul.addr %s244, 2
      %s246 = smul.addr %s242, 6272
      %s247 = sadd.s32 %s245, %s246
      %s248 = smul.addr %s247, 4
      %s249 = scalar_lea.vmem %s0, %s248
      %p250 = pneg %p57
      %p251 = pneg %p54
      %p252 = scmp.lt.s32.totalorder %s21, 0
      %s253 = scalar_select %p252, %s21, 0
      %p254 = scmp.lt.s32.totalorder %s22, 0
      %s255 = scalar_select %p254, %s22, 0
      %s256 = smul.addr %s253, 19
      %s257 = sadd.s32 %s255, %s256
      %s258 = smul.addr %s257, 4
      %s259 = scalar_lea.vmem %s1, %s258
      %p260 = pneg %p85
      %p261 = pneg %p82
      %p262 = scmp.lt.s32.totalorder %s21, 0
      %s263 = scalar_select %p262, %s21, 0
      %p264 = scmp.lt.s32.totalorder %s22, 0
      %s265 = scalar_select %p264, %s22, 0
      %s266 = sadd.s32 %s265, %s263
      %s267 = scalar_lea.vmem %s2, %s266
      %p268 = pneg %p113
      %p269 = pneg %p110
      %p270 = scmp.lt.s32.totalorder %s21, 0
      %s271 = scalar_select %p270, %s21, 0
      %p272 = scmp.lt.s32.totalorder %s22, 0
      %s273 = scalar_select %p272, %s22, 0
      %s274 = sadd.s32 %s273, %s271
      %s275 = scalar_lea.vmem %s3, %s274
      %p276 = pneg %p141
      %p277 = pneg %p138
      %p278 = pneg %p171
      %p279 = pneg %p168
      %s280 = sadd.s32 %s21, %s22
      %s281 = smul.u32 32, %s20
      %p282 = scmp.lt.s32.totalorder %s281, 3135
      %s283 = scalar_select %p282, %s281, 3135
      %p284 = scmp.lt.s32.totalorder %s280, 0
      %s285 = scalar_select %p284, %s280, 0
      %s286 = sadd.s32 %s285, %s283
      %s287 = smul.addr %s286, 4
      %s288 = scalar_lea.vmem %s4, %s287
      %s289 = smul.u32 32, %s20
      %p290 = scmp.lt.s32.totalorder %s21, 0
      %s291 = scalar_select %p290, %s21, 0
      %p292 = scmp.lt.s32.totalorder %s289, 3135
      %s293 = scalar_select %p292, %s289, 3135
      %s294 = smul.addr %s293, 2
      %s295 = smul.addr %s291, 6272
      %s296 = sadd.s32 %s294, %s295
      %s297 = smul.addr %s296, 4
      %s298 = scalar_lea.vmem %s0, %s297
      %s299 = smul.u32 32, %s20
      %p300 = scmp.lt.s32.totalorder %s21, 0
      %s301 = scalar_select %p300, %s21, 0
      %p302 = scmp.lt.s32.totalorder %s22, 0
      %s303 = scalar_select %p302, %s22, 0
      %s304 = smul.addr %s301, 19
      %s305 = sadd.s32 %s303, %s304
      %s306 = smul.addr %s305, 4
      %s307 = scalar_lea.vmem %s1, %s306
      %p308 = scmp.lt.s32.totalorder %s21, 0
      %s309 = scalar_select %p308, %s21, 0
      %p310 = scmp.lt.s32.totalorder %s22, 0
      %s311 = scalar_select %p310, %s22, 0
      %s312 = sadd.s32 %s311, %s309
      %s313 = scalar_lea.vmem %s2, %s312
      %p314 = scmp.lt.s32.totalorder %s21, 0
      %s315 = scalar_select %p314, %s21, 0
      %p316 = scmp.lt.s32.totalorder %s22, 0
      %s317 = scalar_select %p316, %s22, 0
      %s318 = sadd.s32 %s317, %s315
      %s319 = scalar_lea.vmem %s3, %s318
      %s320 = sadd.s32 %s21, %s22
      %s321 = smul.u32 32, %s20
      %p322 = scmp.lt.s32.totalorder %s321, 3135
      %s323 = scalar_select %p322, %s321, 3135
      %p324 = scmp.lt.s32.totalorder %s320, 0
      %s325 = scalar_select %p324, %s320, 0
      %s326 = sadd.s32 %s325, %s323
      %s327 = smul.addr %s326, 4
      %s328 = scalar_lea.vmem %s4, %s327
      %s329 = sadd.s32 %s21, %s22
      %s330 = smul.u32 32, %s20
      %v332 = vld [vmem:[%s298] sm:$0xff]
      %v333 = vld [vmem:[%s298 + $0x8] sm:$0xff]
      %v334 = vld [vmem:[%s298 + $0x10] sm:$0xff]
      %v335 = vld [vmem:[%s298 + $0x18] sm:$0xff]
      %v336 = vld [vmem:[%s298 + $0x20] sm:$0xff]
      %v337 = vld [vmem:[%s298 + $0x28] sm:$0xff]
      %v338 = vld [vmem:[%s298 + $0x30] sm:$0xff]
      %v339 = vld [vmem:[%s298 + $0x38] sm:$0xff]
      %v340 = vld [vmem:[%s298 + $0x40] sm:$0xff]
      %v341 = vld [vmem:[%s298 + $0x48] sm:$0xff]
      %v342 = vld [vmem:[%s298 + $0x50] sm:$0xff]
      %v343 = vld [vmem:[%s298 + $0x58] sm:$0xff]
      %v344 = vld [vmem:[%s298 + $0x60] sm:$0xff]
      %v345 = vld [vmem:[%s298 + $0x68] sm:$0xff]
      %v346 = vld [vmem:[%s298 + $0x70] sm:$0xff]
      %v347 = vld [vmem:[%s298 + $0x78] sm:$0xff]
      %v348 = vld [vmem:[%s298 + $0x80] sm:$0xff]
      %v349 = vld [vmem:[%s298 + $0x88] sm:$0xff]
      %v350 = vld [vmem:[%s298 + $0x90] sm:$0xff]
      %v351 = vld [vmem:[%s298 + $0x98] sm:$0xff]
      %v352 = vld [vmem:[%s298 + $0xa0] sm:$0xff]
      %v353 = vld [vmem:[%s298 + $0xa8] sm:$0xff]
      %v354 = vld [vmem:[%s298 + $0xb0] sm:$0xff]
      %v355 = vld [vmem:[%s298 + $0xb8] sm:$0xff]
      %v356 = vld [vmem:[%s298 + $0xc0] sm:$0xff]
      %v357 = vld [vmem:[%s298 + $0xc8] sm:$0xff]
      %v358 = vld [vmem:[%s298 + $0xd0] sm:$0xff]
      %v359 = vld [vmem:[%s298 + $0xd8] sm:$0xff]
      %v360 = vld [vmem:[%s298 + $0xe0] sm:$0xff]
      %v361 = vld [vmem:[%s298 + $0xe8] sm:$0xff]
      %v362 = vld [vmem:[%s298 + $0xf0] sm:$0xff]
      %v363 = vld [vmem:[%s298 + $0xf8] sm:$0xff]
      %v364 = vld [vmem:[%s307] sm:$0xf]
      %v365 = vld [vmem:[%s307 + $0x4] sm:$0xf]
      %v366 = vld [vmem:[%s307 + $0x8] sm:$0xf]
      %v367 = vld [vmem:[%s307 + $0xc] sm:$0xf]
      %v368 = vld [vmem:[%s307 + $0x10] sm:$0xf]
      %v369 = vld [vmem:[%s307 + $0x14] sm:$0xf]
      %v370 = vld [vmem:[%s307 + $0x18] sm:$0xf]
      %v371 = vld [vmem:[%s307 + $0x1c] sm:$0xf]
      %v372 = vld [vmem:[%s307 + $0x20] sm:$0xf]
      %v373 = vld [vmem:[%s307 + $0x24] sm:$0xf]
      %v374 = vld [vmem:[%s307 + $0x28] sm:$0xf]
      %v375 = vld [vmem:[%s307 + $0x2c] sm:$0xf]
      %v376 = vld [vmem:[%s307 + $0x30] sm:$0xf]
      %v377 = vld [vmem:[%s307 + $0x34] sm:$0xf]
      %v378 = vld [vmem:[%s307 + $0x38] sm:$0xf]
      %v379 = vld [vmem:[%s307 + $0x3c] sm:$0xf]
      %v380 = vld [vmem:[%s307 + $0x40] sm:$0xf]
      %v381 = vld [vmem:[%s307 + $0x44] sm:$0xf]
      %v382 = vld [vmem:[%s307 + $0x48] sm:$0x3]
      %v415 = vunpack.c.l.b16 %v332
      %v416 = vunpack.c.h.b16 %v332
      %v417 = vunpack.c.l.b16 %v333
      %v418 = vunpack.c.h.b16 %v333
      %v419 = vunpack.c.l.b16 %v334
      %v420 = vunpack.c.h.b16 %v334
      %v421 = vunpack.c.l.b16 %v335
      %v422 = vunpack.c.h.b16 %v335
      %v423 = vunpack.c.l.b16 %v336
      %v424 = vunpack.c.h.b16 %v336
      %v425 = vunpack.c.l.b16 %v337
      %v426 = vunpack.c.h.b16 %v337
      %v427 = vunpack.c.l.b16 %v338
      %v428 = vunpack.c.h.b16 %v338
      %v429 = vunpack.c.l.b16 %v339
      %v430 = vunpack.c.h.b16 %v339
      %v431 = vunpack.c.l.b16 %v340
      %v432 = vunpack.c.h.b16 %v340
      %v433 = vunpack.c.l.b16 %v341
      %v434 = vunpack.c.h.b16 %v341
      %v435 = vunpack.c.l.b16 %v342
      %v436 = vunpack.c.h.b16 %v342
      %v437 = vunpack.c.l.b16 %v343
      %v438 = vunpack.c.h.b16 %v343
      %v439 = vunpack.c.l.b16 %v344
      %v440 = vunpack.c.h.b16 %v344
      %v441 = vunpack.c.l.b16 %v345
      %v442 = vunpack.c.h.b16 %v345
      %v443 = vunpack.c.l.b16 %v346
      %v444 = vunpack.c.h.b16 %v346
      %v445 = vunpack.c.l.b16 %v347
      %v446 = vunpack.c.h.b16 %v347
      %v447 = vunpack.c.l.b16 %v348
      %v448 = vunpack.c.h.b16 %v348
      %v449 = vunpack.c.l.b16 %v349
      %v450 = vunpack.c.h.b16 %v349
      %v451 = vunpack.c.l.b16 %v350
      %v452 = vunpack.c.h.b16 %v350
      %v453 = vunpack.c.l.b16 %v351
      %v454 = vunpack.c.h.b16 %v351
      %v455 = vunpack.c.l.b16 %v352
      %v456 = vunpack.c.h.b16 %v352
      %v457 = vunpack.c.l.b16 %v353
      %v458 = vunpack.c.h.b16 %v353
      %v459 = vunpack.c.l.b16 %v354
      %v460 = vunpack.c.h.b16 %v354
      %v461 = vunpack.c.l.b16 %v355
      %v462 = vunpack.c.h.b16 %v355
      %v463 = vunpack.c.l.b16 %v356
      %v464 = vunpack.c.h.b16 %v356
      %v465 = vunpack.c.l.b16 %v357
      %v466 = vunpack.c.h.b16 %v357
      %v467 = vunpack.c.l.b16 %v358
      %v468 = vunpack.c.h.b16 %v358
      %v469 = vunpack.c.l.b16 %v359
      %v470 = vunpack.c.h.b16 %v359
      %v471 = vunpack.c.l.b16 %v360
      %v472 = vunpack.c.h.b16 %v360
      %v473 = vunpack.c.l.b16 %v361
      %v474 = vunpack.c.h.b16 %v361
      %v475 = vunpack.c.l.b16 %v362
      %v476 = vunpack.c.h.b16 %v362
      %v477 = vunpack.c.l.b16 %v363
      %v478 = vunpack.c.h.b16 %v363
      %v479 = vpack.c.b16 %v417, %v415
      %v480 = vpack.c.b16 %v418, %v416
      %v481 = vpack.c.b16 %v421, %v419
      %v482 = vpack.c.b16 %v422, %v420
      %v483 = vpack.c.b16 %v425, %v423
      %v484 = vpack.c.b16 %v426, %v424
      %v485 = vpack.c.b16 %v429, %v427
      %v486 = vpack.c.b16 %v430, %v428
      %v487 = vpack.c.b16 %v433, %v431
      %v488 = vpack.c.b16 %v434, %v432
      %v489 = vpack.c.b16 %v437, %v435
      %v490 = vpack.c.b16 %v438, %v436
      %v491 = vpack.c.b16 %v441, %v439
      %v492 = vpack.c.b16 %v442, %v440
      %v493 = vpack.c.b16 %v445, %v443
      %v494 = vpack.c.b16 %v446, %v444
      %v495 = vpack.c.b16 %v449, %v447
      %v496 = vpack.c.b16 %v450, %v448
      %v497 = vpack.c.b16 %v453, %v451
      %v498 = vpack.c.b16 %v454, %v452
      %v499 = vpack.c.b16 %v457, %v455
      %v500 = vpack.c.b16 %v458, %v456
      %v501 = vpack.c.b16 %v461, %v459
      %v502 = vpack.c.b16 %v462, %v460
      %v503 = vpack.c.b16 %v465, %v463
      %v504 = vpack.c.b16 %v466, %v464
      %v505 = vpack.c.b16 %v469, %v467
      %v506 = vpack.c.b16 %v470, %v468
      %v507 = vpack.c.b16 %v473, %v471
      %v508 = vpack.c.b16 %v474, %v472
      %v509 = vpack.c.b16 %v477, %v475
      %v510 = vpack.c.b16 %v478, %v476
      %v546 = vunpack.c.l.b16 %v364
      %v547 = vunpack.c.l.b16 %v365
      %v548 = vunpack.c.l.b16 %v366
      %v549 = vunpack.c.l.b16 %v367
      %v550 = vunpack.c.l.b16 %v368
      %v551 = vunpack.c.l.b16 %v369
      %v552 = vunpack.c.l.b16 %v370
      %v553 = vunpack.c.l.b16 %v371
      %v554 = vunpack.c.l.b16 %v372
      %v555 = vunpack.c.l.b16 %v373
      %v556 = vunpack.c.l.b16 %v374
      %v557 = vunpack.c.l.b16 %v375
      %v558 = vunpack.c.l.b16 %v376
      %v559 = vunpack.c.l.b16 %v377
      %v560 = vunpack.c.l.b16 %v378
      %v561 = vunpack.c.l.b16 %v379
      %v562 = vunpack.c.l.b16 %v380
      %v563 = vunpack.c.l.b16 %v381
      %v564 = vunpack.c.l.b16 %v382
      %v565 = vpack.c.b16 %v547, %v546
      %v566 = vpack.c.b16 %v549, %v548
      %v567 = vpack.c.b16 %v551, %v550
      %v568 = vpack.c.b16 %v553, %v552
      %v569 = vpack.c.b16 %v555, %v554
      %v570 = vpack.c.b16 %v557, %v556
      %v571 = vpack.c.b16 %v559, %v558
      %v572 = vpack.c.b16 %v561, %v560
      %v573 = vpack.c.b16 %v563, %v562
      %v574 = vpack.c.b16 %v564, %v564
      %vm584 = vcmask 154624
      %v586 = vsel %vm584, %v480, 0
      %v589 = vsel %vm584, %v482, 0
      %v592 = vsel %vm584, %v484, 0
      %v595 = vsel %vm584, %v486, 0
      %v598 = vsel %vm584, %v488, 0
      %v601 = vsel %vm584, %v490, 0
      %v604 = vsel %vm584, %v492, 0
      %v607 = vsel %vm584, %v494, 0
      %v610 = vsel %vm584, %v496, 0
      %v613 = vsel %vm584, %v498, 0
      %v616 = vsel %vm584, %v500, 0
      %v619 = vsel %vm584, %v502, 0
      %v622 = vsel %vm584, %v504, 0
      %v625 = vsel %vm584, %v506, 0
      %v628 = vsel %vm584, %v508, 0
      %v631 = vsel %vm584, %v510, 0
      %vm633 = vcmask 1040384
      %vm634 = vcmask 1041408
      %v635 = vsel %vm633, 4294967295, 65535
      %v636 = vsel %vm634, %v635, 0
      %v638 = vand.u32 %v574, %v636
      %640 = vmatprep.subr.bf16.mxu0 0
      %641 = vmatpush1.bf16.msra.mxu0 %v565
      %642 = vmatprep.subr.bf16.mxu0 0
      %643 = vmatpush1.bf16.msra.mxu0 %v566
      %644 = vmatprep.subr.bf16.mxu0 0
      %645 = vmatpush1.bf16.msra.mxu0 %v567
      %646 = vmatprep.subr.bf16.mxu0 0
      %647 = vmatpush1.bf16.msra.mxu0 %v568
      %648 = vmatprep.subr.bf16.mxu0 0
      %649 = vmatpush1.bf16.msra.mxu0 %v569
      %650 = vmatprep.subr.bf16.mxu0 0
      %651 = vmatpush1.bf16.msra.mxu0 %v570
      %652 = vmatprep.subr.bf16.mxu0 0
      %653 = vmatpush1.bf16.msra.mxu0 %v571
      %654 = vmatprep.subr.bf16.mxu0 0
      %655 = vmatpush1.bf16.msra.mxu0 %v572
      %656 = vmatprep.subr.bf16.mxu0 0
      %657 = vmatpush1.bf16.msra.mxu0 %v573
      %658 = vmatprep.subr.bf16.mxu0 0
      %659 = vmatpush1.bf16.msra.mxu0 %v638
      %660 = vmatprep.subr.bf16.mxu0 0
      %661 = vmatpush1.bf16.msra.mxu0 0
      %662 = vmatprep.subr.bf16.mxu0 0
      %663 = vmatpush1.bf16.msra.mxu0 0
      %664 = vmatprep.subr.bf16.mxu0 0
      %665 = vmatpush1.bf16.msra.mxu0 0
      %666 = vmatprep.subr.bf16.mxu0 0
      %667 = vmatpush1.bf16.msra.mxu0 0
      %668 = vmatprep.subr.bf16.mxu0 0
      %669 = vmatpush1.bf16.msra.mxu0 0
      %670 = vmatprep.subr.bf16.mxu0 0
      %671 = vmatpush1.bf16.msra.mxu0 0
      %672 = vmatprep.mubr.bf16.mxu0 %v586
      %673 = vmatmul.mubr.bf16.gmra.mrb[0].mxu0 %v479
      %v674 = vpop.f32.mrb[0].mxu0
      %v675 = vadd.f32 0.0, %v674
      %v676 = vpop.f32.mrb[0].mxu0
      %v677 = vpop.f32.mrb[0].mxu0
      %v678 = vadd.f32 0.0, %v677
      %v679 = vpop.f32.mrb[0].mxu0
      %680 = vmatprep.mubr.bf16.mxu0 %v589
      %681 = vmatmul.mubr.bf16.gmra.mrb[0].mxu0 %v481
      %v682 = vpop.f32.mrb[0].mxu0
      %v683 = vadd.f32 0.0, %v682
      %v684 = vpop.f32.mrb[0].mxu0
      %v685 = vpop.f32.mrb[0].mxu0
      %v686 = vadd.f32 0.0, %v685
      %v687 = vpop.f32.mrb[0].mxu0
      %688 = vmatprep.mubr.bf16.mxu0 %v592
      %689 = vmatmul.mubr.bf16.gmra.mrb[0].mxu0 %v483
      %v690 = vpop.f32.mrb[0].mxu0
      %v691 = vadd.f32 0.0, %v690
      %v692 = vpop.f32.mrb[0].mxu0
      %v693 = vpop.f32.mrb[0].mxu0
      %v694 = vadd.f32 0.0, %v693
      %v695 = vpop.f32.mrb[0].mxu0
      %696 = vmatprep.mubr.bf16.mxu0 %v595
      %697 = vmatmul.mubr.bf16.gmra.mrb[0].mxu0 %v485
      %v698 = vpop.f32.mrb[0].mxu0
      %v699 = vadd.f32 0.0, %v698
      %v700 = vpop.f32.mrb[0].mxu0
      %v701 = vpop.f32.mrb[0].mxu0
      %v702 = vadd.f32 0.0, %v701
      %v703 = vpop.f32.mrb[0].mxu0
      %704 = vmatprep.mubr.bf16.mxu0 %v598
      %705 = vmatmul.mubr.bf16.gmra.mrb[0].mxu0 %v487
      %v706 = vpop.f32.mrb[0].mxu0
      %v707 = vadd.f32 0.0, %v706
      %v708 = vpop.f32.mrb[0].mxu0
      %v709 = vpop.f32.mrb[0].mxu0
      %v710 = vadd.f32 0.0, %v709
      %v711 = vpop.f32.mrb[0].mxu0
      %712 = vmatprep.mubr.bf16.mxu0 %v601
      %713 = vmatmul.mubr.bf16.gmra.mrb[0].mxu0 %v489
      %v714 = vpop.f32.mrb[0].mxu0
      %v715 = vadd.f32 0.0, %v714
      %v716 = vpop.f32.mrb[0].mxu0
      %v717 = vpop.f32.mrb[0].mxu0
      %v718 = vadd.f32 0.0, %v717
      %v719 = vpop.f32.mrb[0].mxu0
      %720 = vmatprep.mubr.bf16.mxu0 %v604
      %721 = vmatmul.mubr.bf16.gmra.mrb[0].mxu0 %v491
      %v722 = vpop.f32.mrb[0].mxu0
      %v723 = vadd.f32 0.0, %v722
      %v724 = vpop.f32.mrb[0].mxu0
      %v725 = vpop.f32.mrb[0].mxu0
      %v726 = vadd.f32 0.0, %v725
      %v727 = vpop.f32.mrb[0].mxu0
      %728 = vmatprep.mubr.bf16.mxu0 %v607
      %729 = vmatmul.mubr.bf16.gmra.mrb[0].mxu0 %v493
      %v730 = vpop.f32.mrb[0].mxu0
      %v731 = vadd.f32 0.0, %v730
      %v732 = vpop.f32.mrb[0].mxu0
      %v733 = vpop.f32.mrb[0].mxu0
      %v734 = vadd.f32 0.0, %v733
      %v735 = vpop.f32.mrb[0].mxu0
      %736 = vmatprep.mubr.bf16.mxu0 %v610
      %737 = vmatmul.mubr.bf16.gmra.mrb[0].mxu0 %v495
      %v738 = vpop.f32.mrb[0].mxu0
      %v739 = vadd.f32 0.0, %v738
      %v740 = vpop.f32.mrb[0].mxu0
      %v741 = vpop.f32.mrb[0].mxu0
      %v742 = vadd.f32 0.0, %v741
      %v743 = vpop.f32.mrb[0].mxu0
      %744 = vmatprep.mubr.bf16.mxu0 %v613
      %745 = vmatmul.mubr.bf16.gmra.mrb[0].mxu0 %v497
      %v746 = vpop.f32.mrb[0].mxu0
      %v747 = vadd.f32 0.0, %v746
      %v748 = vpop.f32.mrb[0].mxu0
      %v749 = vpop.f32.mrb[0].mxu0
      %v750 = vadd.f32 0.0, %v749
      %v751 = vpop.f32.mrb[0].mxu0
      %752 = vmatprep.mubr.bf16.mxu0 %v616
      %753 = vmatmul.mubr.bf16.gmra.mrb[0].mxu0 %v499
      %v754 = vpop.f32.mrb[0].mxu0
      %v755 = vadd.f32 0.0, %v754
      %v756 = vpop.f32.mrb[0].mxu0
      %v757 = vpop.f32.mrb[0].mxu0
      %v758 = vadd.f32 0.0, %v757
      %v759 = vpop.f32.mrb[0].mxu0
      %760 = vmatprep.mubr.bf16.mxu0 %v619
      %761 = vmatmul.mubr.bf16.gmra.mrb[0].mxu0 %v501
      %v762 = vpop.f32.mrb[0].mxu0
      %v763 = vadd.f32 0.0, %v762
      %v764 = vpop.f32.mrb[0].mxu0
      %v765 = vpop.f32.mrb[0].mxu0
      %v766 = vadd.f32 0.0, %v765
      %v767 = vpop.f32.mrb[0].mxu0
      %768 = vmatprep.mubr.bf16.mxu0 %v622
      %769 = vmatmul.mubr.bf16.gmra.mrb[0].mxu0 %v503
      %v770 = vpop.f32.mrb[0].mxu0
      %v771 = vadd.f32 0.0, %v770
      %v772 = vpop.f32.mrb[0].mxu0
      %v773 = vpop.f32.mrb[0].mxu0
      %v774 = vadd.f32 0.0, %v773
      %v775 = vpop.f32.mrb[0].mxu0
      %776 = vmatprep.mubr.bf16.mxu0 %v625
      %777 = vmatmul.mubr.bf16.gmra.mrb[0].mxu0 %v505
      %v778 = vpop.f32.mrb[0].mxu0
      %v779 = vadd.f32 0.0, %v778
      %v780 = vpop.f32.mrb[0].mxu0
      %v781 = vpop.f32.mrb[0].mxu0
      %v782 = vadd.f32 0.0, %v781
      %v783 = vpop.f32.mrb[0].mxu0
      %784 = vmatprep.mubr.bf16.mxu0 %v628
      %785 = vmatmul.mubr.bf16.gmra.mrb[0].mxu0 %v507
      %v786 = vpop.f32.mrb[0].mxu0
      %v787 = vadd.f32 0.0, %v786
      %v788 = vpop.f32.mrb[0].mxu0
      %v789 = vpop.f32.mrb[0].mxu0
      %v790 = vadd.f32 0.0, %v789
      %v791 = vpop.f32.mrb[0].mxu0
      %792 = vmatprep.mubr.bf16.mxu0 %v631
      %793 = vmatmul.mubr.bf16.gmra.mrb[0].mxu0 %v509
      %v794 = vpop.f32.mrb[0].mxu0
      %v795 = vadd.f32 0.0, %v794
      %v796 = vpop.f32.mrb[0].mxu0
      %v797 = vpop.f32.mrb[0].mxu0
      %v798 = vadd.f32 0.0, %v797
      %v799 = vpop.f32.mrb[0].mxu0
      %800 = vdwg.mxu0
      %801 = vst [vmem:[#allocation2] sm:$0xff] %v675
      %802 = vst [vmem:[#allocation2 + $0x8] sm:$0xff] %v678
      %803 = vst [vmem:[#allocation2 + $0x10] sm:$0xff] %v683
      %804 = vst [vmem:[#allocation2 + $0x18] sm:$0xff] %v686
      %805 = vst [vmem:[#allocation2 + $0x20] sm:$0xff] %v691
      %806 = vst [vmem:[#allocation2 + $0x28] sm:$0xff] %v694
      %807 = vst [vmem:[#allocation2 + $0x30] sm:$0xff] %v699
      %808 = vst [vmem:[#allocation2 + $0x38] sm:$0xff] %v702
      %809 = vst [vmem:[#allocation2 + $0x40] sm:$0xff] %v707
      %810 = vst [vmem:[#allocation2 + $0x48] sm:$0xff] %v710
      %811 = vst [vmem:[#allocation2 + $0x50] sm:$0xff] %v715
      %812 = vst [vmem:[#allocation2 + $0x58] sm:$0xff] %v718
      %813 = vst [vmem:[#allocation2 + $0x60] sm:$0xff] %v723
      %814 = vst [vmem:[#allocation2 + $0x68] sm:$0xff] %v726
      %815 = vst [vmem:[#allocation2 + $0x70] sm:$0xff] %v731
      %816 = vst [vmem:[#allocation2 + $0x78] sm:$0xff] %v734
      %817 = vst [vmem:[#allocation2 + $0x80] sm:$0xff] %v739
      %818 = vst [vmem:[#allocation2 + $0x88] sm:$0xff] %v742
      %819 = vst [vmem:[#allocation2 + $0x90] sm:$0xff] %v747
      %820 = vst [vmem:[#allocation2 + $0x98] sm:$0xff] %v750
      %821 = vst [vmem:[#allocation2 + $0xa0] sm:$0xff] %v755
      %822 = vst [vmem:[#allocation2 + $0xa8] sm:$0xff] %v758
      %823 = vst [vmem:[#allocation2 + $0xb0] sm:$0xff] %v763
      %824 = vst [vmem:[#allocation2 + $0xb8] sm:$0xff] %v766
      %825 = vst [vmem:[#allocation2 + $0xc0] sm:$0xff] %v771
      %826 = vst [vmem:[#allocation2 + $0xc8] sm:$0xff] %v774
      %827 = vst [vmem:[#allocation2 + $0xd0] sm:$0xff] %v779
      %828 = vst [vmem:[#allocation2 + $0xd8] sm:$0xff] %v782
      %829 = vst [vmem:[#allocation2 + $0xe0] sm:$0xff] %v787
      %830 = vst [vmem:[#allocation2 + $0xe8] sm:$0xff] %v790
      %831 = vst [vmem:[#allocation2 + $0xf0] sm:$0xff] %v795
      %832 = vst [vmem:[#allocation2 + $0xf8] sm:$0xff] %v798
      %v833 = vld [vmem:[#allocation2] sm:$0xff]
      %v834 = vld [vmem:[#allocation2 + $0x8] sm:$0xff]
      %v835 = vld [vmem:[#allocation2 + $0x10] sm:$0xff]
      %v836 = vld [vmem:[#allocation2 + $0x18] sm:$0xff]
      %v837 = vld [vmem:[#allocation2 + $0x20] sm:$0xff]
      %v838 = vld [vmem:[#allocation2 + $0x28] sm:$0xff]
      %v839 = vld [vmem:[#allocation2 + $0x30] sm:$0xff]
      %v840 = vld [vmem:[#allocation2 + $0x38] sm:$0xff]
      %v841 = vld [vmem:[#allocation2 + $0x40] sm:$0xff]
      %v842 = vld [vmem:[#allocation2 + $0x48] sm:$0xff]
      %v843 = vld [vmem:[#allocation2 + $0x50] sm:$0xff]
      %v844 = vld [vmem:[#allocation2 + $0x58] sm:$0xff]
      %v845 = vld [vmem:[#allocation2 + $0x60] sm:$0xff]
      %v846 = vld [vmem:[#allocation2 + $0x68] sm:$0xff]
      %v847 = vld [vmem:[#allocation2 + $0x70] sm:$0xff]
      %v848 = vld [vmem:[#allocation2 + $0x78] sm:$0xff]
      %v849 = vld [vmem:[#allocation2 + $0x80] sm:$0xff]
      %v850 = vld [vmem:[#allocation2 + $0x88] sm:$0xff]
      %v851 = vld [vmem:[#allocation2 + $0x90] sm:$0xff]
      %v852 = vld [vmem:[#allocation2 + $0x98] sm:$0xff]
      %v853 = vld [vmem:[#allocation2 + $0xa0] sm:$0xff]
      %v854 = vld [vmem:[#allocation2 + $0xa8] sm:$0xff]
      %v855 = vld [vmem:[#allocation2 + $0xb0] sm:$0xff]
      %v856 = vld [vmem:[#allocation2 + $0xb8] sm:$0xff]
      %v857 = vld [vmem:[#allocation2 + $0xc0] sm:$0xff]
      %v858 = vld [vmem:[#allocation2 + $0xc8] sm:$0xff]
      %v859 = vld [vmem:[#allocation2 + $0xd0] sm:$0xff]
      %v860 = vld [vmem:[#allocation2 + $0xd8] sm:$0xff]
      %v861 = vld [vmem:[#allocation2 + $0xe0] sm:$0xff]
      %v862 = vld [vmem:[#allocation2 + $0xe8] sm:$0xff]
      %v863 = vld [vmem:[#allocation2 + $0xf0] sm:$0xff]
      %v864 = vld [vmem:[#allocation2 + $0xf8] sm:$0xff]
      %v865 = vld [vmem:[%s313] sm:$0x1]
      %v867 = vlaneseq
      %v868 = vshrl.u32 %v867, 7
      %v869 = vsub.s32 0, %v868
      %v870 = vrot.slane %v865, %v869
      %v872 = vmul.f32 %v833, %v870
      %v873 = vmul.f32 %v834, %v870
      %v874 = vmul.f32 %v835, %v870
      %v875 = vmul.f32 %v836, %v870
      %v876 = vmul.f32 %v837, %v870
      %v877 = vmul.f32 %v838, %v870
      %v878 = vmul.f32 %v839, %v870
      %v879 = vmul.f32 %v840, %v870
      %v880 = vmul.f32 %v841, %v870
      %v881 = vmul.f32 %v842, %v870
      %v882 = vmul.f32 %v843, %v870
      %v883 = vmul.f32 %v844, %v870
      %v884 = vmul.f32 %v845, %v870
      %v885 = vmul.f32 %v846, %v870
      %v886 = vmul.f32 %v847, %v870
      %v887 = vmul.f32 %v848, %v870
      %v888 = vmul.f32 %v849, %v870
      %v889 = vmul.f32 %v850, %v870
      %v890 = vmul.f32 %v851, %v870
      %v891 = vmul.f32 %v852, %v870
      %v892 = vmul.f32 %v853, %v870
      %v893 = vmul.f32 %v854, %v870
      %v894 = vmul.f32 %v855, %v870
      %v895 = vmul.f32 %v856, %v870
      %v896 = vmul.f32 %v857, %v870
      %v897 = vmul.f32 %v858, %v870
      %v898 = vmul.f32 %v859, %v870
      %v899 = vmul.f32 %v860, %v870
      %v900 = vmul.f32 %v861, %v870
      %v901 = vmul.f32 %v862, %v870
      %v902 = vmul.f32 %v863, %v870
      %v903 = vmul.f32 %v864, %v870
      %v904 = vld [vmem:[%s319] sm:$0x1]
      %v906 = vlaneseq
      %v907 = vshrl.u32 %v906, 7
      %v908 = vsub.s32 0, %v907
      %v909 = vrot.slane %v904, %v908
      %v911 = vadd.f32 %v872, %v909
      %v912 = vadd.f32 %v873, %v909
      %v913 = vadd.f32 %v874, %v909
      %v914 = vadd.f32 %v875, %v909
      %v915 = vadd.f32 %v876, %v909
      %v916 = vadd.f32 %v877, %v909
      %v917 = vadd.f32 %v878, %v909
      %v918 = vadd.f32 %v879, %v909
      %v919 = vadd.f32 %v880, %v909
      %v920 = vadd.f32 %v881, %v909
      %v921 = vadd.f32 %v882, %v909
      %v922 = vadd.f32 %v883, %v909
      %v923 = vadd.f32 %v884, %v909
      %v924 = vadd.f32 %v885, %v909
      %v925 = vadd.f32 %v886, %v909
      %v926 = vadd.f32 %v887, %v909
      %v927 = vadd.f32 %v888, %v909
      %v928 = vadd.f32 %v889, %v909
      %v929 = vadd.f32 %v890, %v909
      %v930 = vadd.f32 %v891, %v909
      %v931 = vadd.f32 %v892, %v909
      %v932 = vadd.f32 %v893, %v909
      %v933 = vadd.f32 %v894, %v909
      %v934 = vadd.f32 %v895, %v909
      %v935 = vadd.f32 %v896, %v909
      %v936 = vadd.f32 %v897, %v909
      %v937 = vadd.f32 %v898, %v909
      %v938 = vadd.f32 %v899, %v909
      %v939 = vadd.f32 %v900, %v909
      %v940 = vadd.f32 %v901, %v909
      %v941 = vadd.f32 %v902, %v909
      %v942 = vadd.f32 %v903, %v909
      %v943 = vmax.f32 %v911, 0.0
      %v944 = vmax.f32 %v912, 0.0
      %v945 = vmax.f32 %v913, 0.0
      %v946 = vmax.f32 %v914, 0.0
      %v947 = vmax.f32 %v915, 0.0
      %v948 = vmax.f32 %v916, 0.0
      %v949 = vmax.f32 %v917, 0.0
      %v950 = vmax.f32 %v918, 0.0
      %v951 = vmax.f32 %v919, 0.0
      %v952 = vmax.f32 %v920, 0.0
      %v953 = vmax.f32 %v921, 0.0
      %v954 = vmax.f32 %v922, 0.0
      %v955 = vmax.f32 %v923, 0.0
      %v956 = vmax.f32 %v924, 0.0
      %v957 = vmax.f32 %v925, 0.0
      %v958 = vmax.f32 %v926, 0.0
      %v959 = vmax.f32 %v927, 0.0
      %v960 = vmax.f32 %v928, 0.0
      %v961 = vmax.f32 %v929, 0.0
      %v962 = vmax.f32 %v930, 0.0
      %v963 = vmax.f32 %v931, 0.0
      %v964 = vmax.f32 %v932, 0.0
      %v965 = vmax.f32 %v933, 0.0
      %v966 = vmax.f32 %v934, 0.0
      %v967 = vmax.f32 %v935, 0.0
      %v968 = vmax.f32 %v936, 0.0
      %v969 = vmax.f32 %v937, 0.0
      %v970 = vmax.f32 %v938, 0.0
      %v971 = vmax.f32 %v939, 0.0
      %v972 = vmax.f32 %v940, 0.0
      %v973 = vmax.f32 %v941, 0.0
      %v974 = vmax.f32 %v942, 0.0
      %v975 = vpack.c.bf16 %v944, %v943
      %v976 = vpack.c.bf16 %v946, %v945
      %v977 = vpack.c.bf16 %v948, %v947
      %v978 = vpack.c.bf16 %v950, %v949
      %v979 = vpack.c.bf16 %v952, %v951
      %v980 = vpack.c.bf16 %v954, %v953
      %v981 = vpack.c.bf16 %v956, %v955
      %v982 = vpack.c.bf16 %v958, %v957
      %v983 = vpack.c.bf16 %v960, %v959
      %v984 = vpack.c.bf16 %v962, %v961
      %v985 = vpack.c.bf16 %v964, %v963
      %v986 = vpack.c.bf16 %v966, %v965
      %v987 = vpack.c.bf16 %v968, %v967
      %v988 = vpack.c.bf16 %v970, %v969
      %v989 = vpack.c.bf16 %v972, %v971
      %v990 = vpack.c.bf16 %v974, %v973
      %v1007 = vunpack.c.l.b16 %v975
      %v1008 = vunpack.c.h.b16 %v975
      %v1009 = vunpack.c.l.b16 %v976
      %v1010 = vunpack.c.h.b16 %v976
      %v1011 = vunpack.c.l.b16 %v977
      %v1012 = vunpack.c.h.b16 %v977
      %v1013 = vunpack.c.l.b16 %v978
      %v1014 = vunpack.c.h.b16 %v978
      %v1015 = vunpack.c.l.b16 %v979
      %v1016 = vunpack.c.h.b16 %v979
      %v1017 = vunpack.c.l.b16 %v980
      %v1018 = vunpack.c.h.b16 %v980
      %v1019 = vunpack.c.l.b16 %v981
      %v1020 = vunpack.c.h.b16 %v981
      %v1021 = vunpack.c.l.b16 %v982
      %v1022 = vunpack.c.h.b16 %v982
      %v1023 = vunpack.c.l.b16 %v983
      %v1024 = vunpack.c.h.b16 %v983
      %v1025 = vunpack.c.l.b16 %v984
      %v1026 = vunpack.c.h.b16 %v984
      %v1027 = vunpack.c.l.b16 %v985
      %v1028 = vunpack.c.h.b16 %v985
      %v1029 = vunpack.c.l.b16 %v986
      %v1030 = vunpack.c.h.b16 %v986
      %v1031 = vunpack.c.l.b16 %v987
      %v1032 = vunpack.c.h.b16 %v987
      %v1033 = vunpack.c.l.b16 %v988
      %v1034 = vunpack.c.h.b16 %v988
      %v1035 = vunpack.c.l.b16 %v989
      %v1036 = vunpack.c.h.b16 %v989
      %v1037 = vunpack.c.l.b16 %v990
      %v1038 = vunpack.c.h.b16 %v990
      %v1039 = vpack.c.b16 %v1007, %v1007
      %v1040 = vpack.c.b16 %v1008, %v1008
      %v1041 = vpack.c.b16 %v1009, %v1009
      %v1042 = vpack.c.b16 %v1010, %v1010
      %v1043 = vpack.c.b16 %v1011, %v1011
      %v1044 = vpack.c.b16 %v1012, %v1012
      %v1045 = vpack.c.b16 %v1013, %v1013
      %v1046 = vpack.c.b16 %v1014, %v1014
      %v1047 = vpack.c.b16 %v1015, %v1015
      %v1048 = vpack.c.b16 %v1016, %v1016
      %v1049 = vpack.c.b16 %v1017, %v1017
      %v1050 = vpack.c.b16 %v1018, %v1018
      %v1051 = vpack.c.b16 %v1019, %v1019
      %v1052 = vpack.c.b16 %v1020, %v1020
      %v1053 = vpack.c.b16 %v1021, %v1021
      %v1054 = vpack.c.b16 %v1022, %v1022
      %v1055 = vpack.c.b16 %v1023, %v1023
      %v1056 = vpack.c.b16 %v1024, %v1024
      %v1057 = vpack.c.b16 %v1025, %v1025
      %v1058 = vpack.c.b16 %v1026, %v1026
      %v1059 = vpack.c.b16 %v1027, %v1027
      %v1060 = vpack.c.b16 %v1028, %v1028
      %v1061 = vpack.c.b16 %v1029, %v1029
      %v1062 = vpack.c.b16 %v1030, %v1030
      %v1063 = vpack.c.b16 %v1031, %v1031
      %v1064 = vpack.c.b16 %v1032, %v1032
      %v1065 = vpack.c.b16 %v1033, %v1033
      %v1066 = vpack.c.b16 %v1034, %v1034
      %v1067 = vpack.c.b16 %v1035, %v1035
      %v1068 = vpack.c.b16 %v1036, %v1036
      %v1069 = vpack.c.b16 %v1037, %v1037
      %v1070 = vpack.c.b16 %v1038, %v1038
      %1103 = vst [vmem:[%s328] sm:$0xf] %v1039
      %1104 = vst [vmem:[%s328 + $0x4] sm:$0xf] %v1040
      %1105 = vst [vmem:[%s328 + $0x8] sm:$0xf] %v1041
      %1106 = vst [vmem:[%s328 + $0xc] sm:$0xf] %v1042
      %1107 = vst [vmem:[%s328 + $0x10] sm:$0xf] %v1043
      %1108 = vst [vmem:[%s328 + $0x14] sm:$0xf] %v1044
      %1109 = vst [vmem:[%s328 + $0x18] sm:$0xf] %v1045
      %1110 = vst [vmem:[%s328 + $0x1c] sm:$0xf] %v1046
      %1111 = vst [vmem:[%s328 + $0x20] sm:$0xf] %v1047
      %1112 = vst [vmem:[%s328 + $0x24] sm:$0xf] %v1048
      %1113 = vst [vmem:[%s328 + $0x28] sm:$0xf] %v1049
      %1114 = vst [vmem:[%s328 + $0x2c] sm:$0xf] %v1050
      %1115 = vst [vmem:[%s328 + $0x30] sm:$0xf] %v1051
      %1116 = vst [vmem:[%s328 + $0x34] sm:$0xf] %v1052
      %1117 = vst [vmem:[%s328 + $0x38] sm:$0xf] %v1053
      %1118 = vst [vmem:[%s328 + $0x3c] sm:$0xf] %v1054
      %1119 = vst [vmem:[%s328 + $0x40] sm:$0xf] %v1055
      %1120 = vst [vmem:[%s328 + $0x44] sm:$0xf] %v1056
      %1121 = vst [vmem:[%s328 + $0x48] sm:$0xf] %v1057
      %1122 = vst [vmem:[%s328 + $0x4c] sm:$0xf] %v1058
      %1123 = vst [vmem:[%s328 + $0x50] sm:$0xf] %v1059
      %1124 = vst [vmem:[%s328 + $0x54] sm:$0xf] %v1060
      %1125 = vst [vmem:[%s328 + $0x58] sm:$0xf] %v1061
      %1126 = vst [vmem:[%s328 + $0x5c] sm:$0xf] %v1062
      %1127 = vst [vmem:[%s328 + $0x60] sm:$0xf] %v1063
      %1128 = vst [vmem:[%s328 + $0x64] sm:$0xf] %v1064
      %1129 = vst [vmem:[%s328 + $0x68] sm:$0xf] %v1065
      %1130 = vst [vmem:[%s328 + $0x6c] sm:$0xf] %v1066
      %1131 = vst [vmem:[%s328 + $0x70] sm:$0xf] %v1067
      %1132 = vst [vmem:[%s328 + $0x74] sm:$0xf] %v1068
      %1133 = vst [vmem:[%s328 + $0x78] sm:$0xf] %v1069
      %1134 = vst [vmem:[%s328 + $0x7c] sm:$0xf] %v1070
      %s1135 = sadd.s32 %s21, %s22
      %s1136 = smul.u32 32, %s20
      %p1137 = scmp.lt.s32.totalorder %s1136, 3135
      %s1138 = scalar_select %p1137, %s1136, 3135
      %p1139 = scmp.lt.s32.totalorder %s1135, 0
      %s1140 = scalar_select %p1139, %s1135, 0
      %s1141 = sadd.s32 %s1140, %s1138
      %s1142 = smul.addr %s1141, 4
      %s1143 = scalar_lea.vmem %s4, %s1142
      // Predicated region
      $region37: #{stem_forward.1} parent=35 // pred_check
        %p1144 = pneg %p168
      $region38: #{stem_forward.1} parent=35 // pred_check_branch
        %1146 = sbr.rel (%p1144) target = $region40
      $region39: #{stem_forward.1} parent=35 // pred_region
        %s1147 = sadd.s32 %s21, %s22
        %s1148 = smul.u32 32, %s20
      $region40: #{stem_forward.1} parent=35 // pred_fallthru
        _
    $region36: #{stem_forward.1} parent=5 // pred_fallthru
      _
    %p1149 = scmp.le.s32.totalorder 2, %s10
    // Predicated region
    $region41: #{stem_forward.1} parent=5 // pred_check
      %p1150 = pneg %p1149
    $region42: #{stem_forward.1} parent=5 // pred_check_branch
      %1152 = sbr.rel (%p1150) target = $region44
    $region43: #{stem_forward.1} parent=5 // pred_region
      %s1153 = ssub.s32 %s10, 2
      // Predicated region
      $region45: #{stem_forward.1} parent=43 // pred_check
        %p1154 = pneg %p174
      $region46: #{stem_forward.1} parent=43 // pred_check_branch
        %1156 = sbr.rel (%p1154) target = $region48
      $region47: #{stem_forward.1} parent=43 // pred_region
        %s1157 = sadd.s32 %s24, %s25
        %s1158 = smul.u32 32, %s23
        %p1159 = scmp.lt.s32.totalorder %s1158, 3135
        %s1160 = scalar_select %p1159, %s1158, 3135
        %p1161 = scmp.lt.s32.totalorder %s1157, 0
        %s1162 = scalar_select %p1161, %s1157, 0
        %s1163 = sadd.s32 %s1162, %s1160
        %s1164 = smul.addr %s1163, 4
        %s1165 = scalar_lea.vmem %s4, %s1164
      $region48: #{stem_forward.1} parent=43 // pred_fallthru
        _
    $region44: #{stem_forward.1} parent=5 // pred_fallthru
      _
  $region6: #{stem_forward.1} parent=0 // loop_footer
    %s14 = sadd.s32 1, %s10
  $region7: #{stem_forward.1} parent=0 // loop_footer_branch
    %9 = sbr.rel target = $region3
  $region8: #{stem_forward.1} parent=0 // loop_exit
    _

</llo_original>
